<compile_context>
chip_gen: v7x
topology: tpu7x:2x2x1
jax: 0.10.0
libtpu: 0.0.40
codegen_flags: <defaults>
</compile_context>

<pallas_src>
import functools

import jax
import jax.numpy as jnp
from jax import lax
from jax.experimental import pallas as pl
from jax.experimental.pallas import tpu as pltpu


def _attn_kernel(q_ref, k_ref, wqt_ref, bq_ref, colbias_ref, blockbias_ref,
                 out_ref, *rest, scaling, with_attnw):
    # q_ref:         (gt, G*T, D)   packed queries (f32 or bf16, straight from HBM)
    # k_ref:         (gt, G*S, D)   packed entity embeddings (k == v, no projection)
    # wqt_ref:       (D, D)         q_proj weight, pre-transposed to (in, out)
    # bq_ref:        (1, D)         q_proj bias (f32)
    # colbias_ref:   (gt, 1, G*S)   additive key-padding mask: -inf at pads, 0 else
    # blockbias_ref: (G*T, G*S)     block-diagonal mask: 0 on own batch, -inf across
    q_in = q_ref[...]
    k = k_ref[...]
    gt, gtT, d = q_in.shape

    # q = q_proj(query) * scaling; group-tiles * rows folded into the matmul rows.
    q2 = jnp.dot(q_in.reshape(gt * gtT, d), wqt_ref[...],
                 preferred_element_type=jnp.float32)
    q = ((q2 + bq_ref[...]) * scaling).reshape(gt, gtT, d)

    # scores = q @ k^T : contract trailing D dims, batched over the group-tile dim.
    s = lax.dot_general(q.astype(q_in.dtype), k,
                        (((2,), (2,)), ((0,), (0,))),
                        preferred_element_type=jnp.float32)      # (gt, G*T, G*S) f32

    colbias = colbias_ref[...]                                    # -inf at padded keys
    # Softmax path: clamp the padding bias to a large finite negative so a fully
    # padded key row produces finite (garbage) output instead of NaN (torch NaNs);
    # for normal rows exp underflows to exactly 0 for masked columns either way.
    s_soft = (s + jnp.maximum(colbias, jnp.float32(-1e30))) + blockbias_ref[...][None]
    m = jnp.max(s_soft, axis=-1, keepdims=True)
    e = jnp.exp(s_soft - m)
    denom = jnp.sum(e, axis=-1, keepdims=True)
    p = e * pl.reciprocal(denom, approx=True)     # EUP slot; ~1e-3 rel error in probs

    # attn_output = probs @ v (v == k): contract the packed key axis, batched.
    out = lax.dot_general(p.astype(k.dtype), k,
                          (((2,), (1,)), ((0,), (0,))),
                          preferred_element_type=jnp.float32)    # (gt, G*T, D)
    out_ref[...] = out.astype(out_ref.dtype)
    if with_attnw:
        # Masked pre-softmax logits with exact -inf at pads (torch semantics); the
        # cross-batch blocks are discarded by the wrapper's diagonal extraction.
        rest[0][...] = (s + colbias).astype(rest[0].dtype)


def _device_kind():
    try:
        return jax.devices()[0].device_kind.lower()
    except Exception:
        return ""


def attention_forward(query, key, key_padding_mask, wq, bq, *,
                      output_attentions=True, use_bf16_matmul=None,
                      attn_weights_dtype=jnp.float32):
    """query: (T, B, D), key: (S, B, D), key_padding_mask: (B, S) bool (True = pad).

    Returns (attn_output (T, B, D), attn_weights (B, 1, T, S) or None), matching the
    PyTorch module's forward (layer_state=None path).  use_bf16_matmul=None picks
    bf16 MXU feed automatically on v5e, f32 elsewhere.
    """
    T, B, D = query.shape
    S = key.shape[0]
    scaling = float(D) ** (-0.5)

    kind = _device_kind()
    is_v7 = ("v7" in kind) or ("tpu7" in kind)
    is_v5e = ("v5e" in kind) or ("v5 lite" in kind) or ("v5lite" in kind)
    if use_bf16_matmul is None:
        use_bf16_matmul = is_v5e          # bf16-native MXU + lowest HBM bandwidth
    in_dtype = jnp.bfloat16 if use_bf16_matmul else jnp.float32
    in_bytes = jnp.dtype(in_dtype).itemsize
    aw_bytes = jnp.dtype(attn_weights_dtype).itemsize if output_attentions else 0

    # Lane packing: G batches share the 128-lane axis of the score/softmax stage.
    G = max(1, 128 // S)
    GT, GS = G * T, G * S
    NG = pl.cdiv(B, G)                    # number of packed groups

    # Per-step VMEM footprint (double-buffered pipeline blocks + resident weights).
    def _step_bytes(steps):
        gt_ = pl.cdiv(NG, steps)
        per_block = gt_ * (GT * D * in_bytes + GS * D * in_bytes + GS * 4
                           + GT * D * 4 + GT * GS * aw_bytes)
        fixed = D * D * in_bytes + D * 4 + GT * GS * 4
        return 2 * per_block + fixed

    # v5e/v6e: single TensorCore -> one grid step.  v7x: >=2 steps per core so the
    # input DMA of step i+1 overlaps compute of step i.
    steps = min(4, NG) if is_v7 else 1
    budget = (40 << 20) if is_v7 else (96 << 20)
    while steps < NG and _step_bytes(steps) > budget:
        steps += 1
    gt = pl.cdiv(NG, steps)
    ngroups = steps * gt
    Bp = ngroups * G
    vmem_cap = (56 << 20) if is_v7 else (112 << 20)
    vmem_limit = int(min(vmem_cap, max(32 << 20, int(_step_bytes(steps) * 1.5))))

    # Batch-major + group packing (one XLA transpose each for q and k; required so
    # packed rows/columns are batch-contiguous).
    q_b = jnp.transpose(query, (1, 0, 2))        # (B, T, D)
    k_b = jnp.transpose(key, (1, 0, 2))          # (B, S, D)
    kpm = key_padding_mask
    pad_b = Bp - B
    if pad_b:
        q_b = jnp.pad(q_b, ((0, pad_b), (0, 0), (0, 0)))
        k_b = jnp.pad(k_b, ((0, pad_b), (0, 0), (0, 0)))
        kpm = jnp.pad(kpm, ((0, pad_b), (0, 0)))         # False => valid, no NaN
    q_pack = q_b.reshape(ngroups, GT, D).astype(in_dtype)
    k_pack = k_b.reshape(ngroups, GS, D).astype(in_dtype)
    colbias = jnp.where(kpm, jnp.float32(-jnp.inf),
                        jnp.float32(0.0)).reshape(ngroups, 1, GS)

    # Block-diagonal bias: -inf wherever a packed query row and key column belong
    # to different batches of the group (keeps the per-batch softmax exact).
    row_g = jnp.arange(GT, dtype=jnp.int32) // T
    col_g = jnp.arange(GS, dtype=jnp.int32) // S
    blockbias = jnp.where(row_g[:, None] == col_g[None, :],
                          jnp.float32(0.0), jnp.float32(-jnp.inf))   # (GT, GS)

    # torch nn.Linear weight is (out, in); transpose once so the kernel matmul is plain.
    wqt = jnp.transpose(wq).astype(in_dtype)             # (D_in, D_out)
    bq2 = bq.reshape(1, D).astype(jnp.float32)

    kernel = functools.partial(_attn_kernel, scaling=scaling,
                               with_attnw=output_attentions)

    in_specs = [
        pl.BlockSpec((gt, GT, D), lambda i: (i, 0, 0)),     # q_pack
        pl.BlockSpec((gt, GS, D), lambda i: (i, 0, 0)),     # k_pack
        pl.BlockSpec((D, D), lambda i: (0, 0)),             # wqt
        pl.BlockSpec((1, D), lambda i: (0, 0)),             # bq
        pl.BlockSpec((gt, 1, GS), lambda i: (i, 0, 0)),     # key-padding bias
        pl.BlockSpec((GT, GS), lambda i: (0, 0)),           # block-diagonal bias
    ]
    out_spec_main = pl.BlockSpec((gt, GT, D), lambda i: (i, 0, 0))

    if output_attentions:
        out_shape = (jax.ShapeDtypeStruct((ngroups, GT, D), jnp.float32),
                     jax.ShapeDtypeStruct((ngroups, GT, GS), attn_weights_dtype))
        out_specs = [out_spec_main,
                     pl.BlockSpec((gt, GT, GS), lambda i: (i, 0, 0))]
    else:
        out_shape = jax.ShapeDtypeStruct((ngroups, GT, D), jnp.float32)
        out_specs = out_spec_main

    flops = 2 * ngroups * GT * D * D + 4 * ngroups * GT * GS * D
    bytes_accessed = int((q_pack.size + k_pack.size + wqt.size) * in_bytes
                         + (colbias.size + blockbias.size + bq2.size) * 4
                         + ngroups * GT * D * 4
                         + ngroups * GT * GS * aw_bytes)
    cost = pl.CostEstimate(flops=int(flops),
                           transcendentals=int(ngroups * GT * GS),
                           bytes_accessed=bytes_accessed)

    result = pl.pallas_call(
        kernel,
        out_shape=out_shape,
        grid_spec=pltpu.PrefetchScalarGridSpec(
            num_scalar_prefetch=0,
            grid=(steps,),
            in_specs=in_specs,
            out_specs=out_specs,
        ),
        compiler_params=pltpu.CompilerParams(
            dimension_semantics=("parallel",),
            vmem_limit_bytes=vmem_limit),
        cost_estimate=cost,
    )(q_pack, k_pack, wqt, bq2, colbias, blockbias)

    if output_attentions:
        out_packed, attnw_packed = result
        # Extract the per-batch diagonal (T, S) blocks of the packed logits.
        aw5 = attnw_packed.reshape(ngroups, G, T, G, S)
        idx = jnp.arange(G)
        aw = aw5[:, idx, :, idx, :]                        # (G, ngroups, T, S)
        aw = jnp.transpose(aw, (1, 0, 2, 3)).reshape(Bp, T, S)[:B]
        attn_weights = aw.reshape(B, 1, T, S)
    else:
        out_packed, attn_weights = result, None

    out_b = out_packed.reshape(Bp, T, D)[:B]               # (B, T, D)
    attn_output = jnp.transpose(out_b, (1, 0, 2))          # back to (T, B, D)
    return attn_output, attn_weights


def _reference(query, key, key_padding_mask, wq, bq):
    """Pure-JAX reference mirroring the PyTorch forward (layer_state=None)."""
    T, B, D = query.shape
    S = key.shape[0]
    scaling = float(D) ** (-0.5)
    q = (jnp.einsum("tbd,ed->tbe", query, wq) + bq) * scaling
    qb = jnp.transpose(q, (1, 0, 2))                    # (B, T, D)
    kb = jnp.transpose(key, (1, 0, 2))                  # (B, S, D)
    s = jnp.einsum("btd,bsd->bts", qb, kb)              # (B, T, S)
    s = jnp.where(key_padding_mask[:, None, :], -jnp.inf, s)
    p = jax.nn.softmax(s, axis=-1)
    out = jnp.einsum("bts,bsd->btd", p, kb)
    return jnp.transpose(out, (1, 0, 2)), s.reshape(B, 1, T, S)


if __name__ == "__main__":
    # Small shapes: hidden_size=32, tgt_len=8, src_len=16, batch=2
    T, S, B, D = 8, 16, 2, 32
    key0 = jax.random.PRNGKey(0)
    k_q, k_k, k_w, k_b, k_m = jax.random.split(key0, 5)

    query = jax.random.normal(k_q, (T, B, D), dtype=jnp.float32)
    ent_key = jax.random.normal(k_k, (S, B, D), dtype=jnp.float32)
    wq = jax.random.normal(k_w, (D, D), dtype=jnp.float32) * (1.0 / jnp.sqrt(D))
    bq = jax.random.normal(k_b, (D,), dtype=jnp.float32) * 0.01
    # boolean padding mask (True == padded); keep at least one valid key per batch.
    key_padding_mask = jax.random.bernoulli(k_m, p=0.25, shape=(B, S))
    key_padding_mask = key_padding_mask.at[:, 0].set(False)

    ref_out, ref_w = _reference(query, ent_key, key_padding_mask, wq, bq)

    # f32 path with attention weights.
    attn_out, attn_w = attention_forward(query, ent_key, key_padding_mask, wq, bq,
                                         output_attentions=True,
                                         use_bf16_matmul=False)
    jax.block_until_ready((attn_out, attn_w))
    assert attn_out.shape == (T, B, D)
    assert attn_w.shape == (B, 1, T, S)
    # Logits checked tightly (no reciprocal involved); -inf positions must match exactly.
    finite = ~jnp.isinf(ref_w)
    assert bool(jnp.all(jnp.isinf(attn_w) == jnp.isinf(ref_w)))
    assert jnp.allclose(jnp.where(finite, attn_w, 0.0),
                        jnp.where(finite, ref_w, 0.0), atol=1e-3, rtol=1e-3)
    # Output tolerance covers the EUP approximate-reciprocal softmax normalization.
    assert jnp.allclose(attn_out, ref_out, atol=2e-2, rtol=2e-2)

    # output_attentions=False path: single-output kernel (no logits writeback).
    attn_out2, attn_w2 = attention_forward(query, ent_key, key_padding_mask, wq, bq,
                                           output_attentions=False,
                                           use_bf16_matmul=False)
    jax.block_until_ready(attn_out2)
    assert attn_w2 is None
    assert jnp.allclose(attn_out2, ref_out, atol=2e-2, rtol=2e-2)

    # bf16-MXU fast path; f32 accumulation, looser tolerance for bf16-fed matmuls.
    attn_out3, _ = attention_forward(query, ent_key, key_padding_mask, wq, bq,
                                     output_attentions=False, use_bf16_matmul=True)
    jax.block_until_ready(attn_out3)
    assert jnp.allclose(attn_out3, ref_out, atol=6e-2, rtol=6e-2)

    # Multi-group case (B > 128 // S): exercises group padding, gt > 1 tiles and the
    # diagonal-block extraction of the packed attention weights.
    B2 = 10
    kq2, kk2, km2 = jax.random.split(jax.random.PRNGKey(1), 3)
    query2 = jax.random.normal(kq2, (T, B2, D), dtype=jnp.float32)
    ent_key2 = jax.random.normal(kk2, (S, B2, D), dtype=jnp.float32)
    mask2 = jax.random.bernoulli(km2, p=0.25, shape=(B2, S)).at[:, 0].set(False)
    ref_out2, ref_w2 = _reference(query2, ent_key2, mask2, wq, bq)
    got_out2, got_w2 = attention_forward(query2, ent_key2, mask2, wq, bq,
                                         output_attentions=True,
                                         use_bf16_matmul=False)
    jax.block_until_ready((got_out2, got_w2))
    finite2 = ~jnp.isinf(ref_w2)
    assert bool(jnp.all(jnp.isinf(got_w2) == jnp.isinf(ref_w2)))
    assert jnp.allclose(jnp.where(finite2, got_w2, 0.0),
                        jnp.where(finite2, ref_w2, 0.0), atol=1e-3, rtol=1e-3)
    assert jnp.allclose(got_out2, ref_out2, atol=2e-2, rtol=2e-2)

    # TODO(synk): the layer_state / saved-state KV-cache branch (prev_key reuse and
    # mask concatenation) is host-side control flow outside this kernel.
    print("KERNEL_OK")
</pallas_src>

<mosaic_0001>
module attributes {stable_mosaic.version = 11 : i64} {
  func.func @_attn_kernel(%arg0: i32, %arg1: memref<1x64x32xf32, #tpu.memory_space<vmem>>, %arg2: memref<1x128x32xf32, #tpu.memory_space<vmem>>, %arg3: memref<32x32xf32, #tpu.memory_space<vmem>>, %arg4: memref<1x32xf32, #tpu.memory_space<vmem>>, %arg5: memref<1x1x128xf32, #tpu.memory_space<vmem>>, %arg6: memref<64x128xf32, #tpu.memory_space<vmem>>, %arg7: memref<1x64x32xf32, #tpu.memory_space<vmem>>, %arg8: memref<1x64x128xf32, #tpu.memory_space<vmem>>) attributes {dimension_semantics = [#tpu.dimension_semantics<parallel>], iteration_bounds = array<i64: 1>, scalar_prefetch = 0 : i64, scratch_operands = 0 : i64, tpu.core_type = #tpu.core_type<tc>, window_params = [{transform_indices = @transform_0, window_bounds = array<i64: 1, 64, 32>}, {transform_indices = @transform_1, window_bounds = array<i64: 1, 128, 32>}, {pipeline_mode = #tpu.pipeline_mode<synchronous>, transform_indices = @transform_2, window_bounds = array<i64: 32, 32>}, {pipeline_mode = #tpu.pipeline_mode<synchronous>, transform_indices = @transform_3, window_bounds = array<i64: 1, 32>}, {transform_indices = @transform_4, window_bounds = array<i64: 1, 1, 128>}, {pipeline_mode = #tpu.pipeline_mode<synchronous>, transform_indices = @transform_5, window_bounds = array<i64: 64, 128>}, {transform_indices = @transform_6, window_bounds = array<i64: 1, 64, 32>}, {transform_indices = @transform_7, window_bounds = array<i64: 1, 64, 128>}]} {
    %c0 = arith.constant 0 : index
    %c0_0 = arith.constant 0 : index
    %c0_1 = arith.constant 0 : index
    %0 = vector.load %arg1[%c0, %c0_0, %c0_1] : memref<1x64x32xf32, #tpu.memory_space<vmem>>, vector<1x64x32xf32>
    %c0_2 = arith.constant 0 : index
    %c0_3 = arith.constant 0 : index
    %c0_4 = arith.constant 0 : index
    %1 = vector.load %arg2[%c0_2, %c0_3, %c0_4] : memref<1x128x32xf32, #tpu.memory_space<vmem>>, vector<1x128x32xf32>
    %2 = vector.shape_cast %0 : vector<1x64x32xf32> to vector<64x32xf32>
    %c0_5 = arith.constant 0 : index
    %c0_6 = arith.constant 0 : index
    %3 = vector.load %arg3[%c0_5, %c0_6] : memref<32x32xf32, #tpu.memory_space<vmem>>, vector<32x32xf32>
    %cst = arith.constant dense<0.000000e+00> : vector<64x32xf32>
    %4 = tpu.matmul %2, %3, %cst {dimension_numbers = #tpu.dot_dimension_numbers<[1], [0], [0], [1], [0, 0, 1, 1], [], []>} : vector<64x32xf32>, vector<32x32xf32>, vector<64x32xf32> -> vector<64x32xf32>
    %c0_7 = arith.constant 0 : index
    %c0_8 = arith.constant 0 : index
    %5 = vector.load %arg4[%c0_7, %c0_8] : memref<1x32xf32, #tpu.memory_space<vmem>>, vector<1x32xf32>
    %6 = vector.broadcast %5 : vector<1x32xf32> to vector<64x32xf32>
    %7 = arith.addf %4, %6 : vector<64x32xf32>
    %cst_9 = arith.constant 0.176776692 : f32
    %8 = vector.broadcast %cst_9 : f32 to vector<64x32xf32>
    %9 = arith.mulf %7, %8 : vector<64x32xf32>
    %10 = vector.shape_cast %9 : vector<64x32xf32> to vector<1x64x32xf32>
    %cst_10 = arith.constant dense<0.000000e+00> : vector<1x64x128xf32>
    %11 = tpu.matmul %10, %1, %cst_10 {dimension_numbers = #tpu.dot_dimension_numbers<[2], [2], [1], [1], [0, 0, 0, 1, 1, 1], [0], [0]>} : vector<1x64x32xf32>, vector<1x128x32xf32>, vector<1x64x128xf32> -> vector<1x64x128xf32>
    %c0_11 = arith.constant 0 : index
    %c0_12 = arith.constant 0 : index
    %c0_13 = arith.constant 0 : index
    %12 = vector.load %arg5[%c0_11, %c0_12, %c0_13] : memref<1x1x128xf32, #tpu.memory_space<vmem>>, vector<1x1x128xf32>
    %cst_14 = arith.constant -1.000000e+30 : f32
    %13 = vector.broadcast %cst_14 : f32 to vector<1x1x128xf32>
    %14 = arith.maximumf %12, %13 : vector<1x1x128xf32>
    %15 = vector.broadcast %14 : vector<1x1x128xf32> to vector<1x64x128xf32>
    %16 = arith.addf %11, %15 : vector<1x64x128xf32>
    %c0_15 = arith.constant 0 : index
    %c0_16 = arith.constant 0 : index
    %17 = vector.load %arg6[%c0_15, %c0_16] : memref<64x128xf32, #tpu.memory_space<vmem>>, vector<64x128xf32>
    %18 = vector.shape_cast %17 : vector<64x128xf32> to vector<1x64x128xf32>
    %19 = arith.addf %16, %18 : vector<1x64x128xf32>
    %cst_17 = arith.constant dense<0xFF800000> : vector<1x64xf32>
    %20 = vector.multi_reduction <maximumf>, %19, %cst_17 [2] : vector<1x64x128xf32> to vector<1x64xf32>
    %21 = vector.shape_cast %20 : vector<1x64xf32> to vector<1x64x1xf32>
    %22 = vector.broadcast %21 : vector<1x64x1xf32> to vector<1x64x128xf32>
    %23 = arith.subf %19, %22 : vector<1x64x128xf32>
    %24 = math.exp %23 : vector<1x64x128xf32>
    %cst_18 = arith.constant dense<0.000000e+00> : vector<1x64xf32>
    %25 = vector.multi_reduction <add>, %24, %cst_18 [2] : vector<1x64x128xf32> to vector<1x64xf32>
    %26 = vector.shape_cast %25 : vector<1x64xf32> to vector<1x64x1xf32>
    %27 = tpu.reciprocal %26 {approx = true} : vector<1x64x1xf32> -> vector<1x64x1xf32>
    %28 = vector.broadcast %27 : vector<1x64x1xf32> to vector<1x64x128xf32>
    %29 = arith.mulf %24, %28 : vector<1x64x128xf32>
    %cst_19 = arith.constant dense<0.000000e+00> : vector<1x64x32xf32>
    %30 = tpu.matmul %29, %1, %cst_19 {dimension_numbers = #tpu.dot_dimension_numbers<[2], [1], [1], [2], [0, 0, 0, 1, 1, 2], [0], [0]>} : vector<1x64x128xf32>, vector<1x128x32xf32>, vector<1x64x32xf32> -> vector<1x64x32xf32>
    %c0_20 = arith.constant 0 : index
    %c0_21 = arith.constant 0 : index
    %c0_22 = arith.constant 0 : index
    %31 = vector.load %arg7[%c0_20, %c0_21, %c0_22] : memref<1x64x32xf32, #tpu.memory_space<vmem>>, vector<1x64x32xf32>
    tpu.vector_store %arg7[%c0_20, %c0_21, %c0_22], %30 {strides = array<i32>} : memref<1x64x32xf32, #tpu.memory_space<vmem>>, vector<1x64x32xf32>,
    %32 = vector.broadcast %12 : vector<1x1x128xf32> to vector<1x64x128xf32>
    %33 = arith.addf %11, %32 : vector<1x64x128xf32>
    %c0_23 = arith.constant 0 : index
    %c0_24 = arith.constant 0 : index
    %c0_25 = arith.constant 0 : index
    %34 = vector.load %arg8[%c0_23, %c0_24, %c0_25] : memref<1x64x128xf32, #tpu.memory_space<vmem>>, vector<1x64x128xf32>
    tpu.vector_store %arg8[%c0_23, %c0_24, %c0_25], %33 {strides = array<i32>} : memref<1x64x128xf32, #tpu.memory_space<vmem>>, vector<1x64x128xf32>,
    return
  }
  func.func @transform_0(%arg0: i32) -> (i32, i32, i32) {
    %c0_i32 = arith.constant 0 : i32
    %c0_i32_0 = arith.constant 0 : i32
    %c0_i32_1 = arith.constant 0 : i32
    return %arg0, %c0_i32, %c0_i32_0 : i32, i32, i32
  }
  func.func @transform_1(%arg0: i32) -> (i32, i32, i32) {
    %c0_i32 = arith.constant 0 : i32
    %c0_i32_0 = arith.constant 0 : i32
    %c0_i32_1 = arith.constant 0 : i32
    return %arg0, %c0_i32, %c0_i32_0 : i32, i32, i32
  }
  func.func @transform_2(%arg0: i32) -> (i32, i32) {
    %c0_i32 = arith.constant 0 : i32
    %c0_i32_0 = arith.constant 0 : i32
    %c0_i32_1 = arith.constant 0 : i32
    return %c0_i32, %c0_i32_0 : i32, i32
  }
  func.func @transform_3(%arg0: i32) -> (i32, i32) {
    %c0_i32 = arith.constant 0 : i32
    %c0_i32_0 = arith.constant 0 : i32
    %c0_i32_1 = arith.constant 0 : i32
    return %c0_i32, %c0_i32_0 : i32, i32
  }
  func.func @transform_4(%arg0: i32) -> (i32, i32, i32) {
    %c0_i32 = arith.constant 0 : i32
    %c0_i32_0 = arith.constant 0 : i32
    %c0_i32_1 = arith.constant 0 : i32
    return %arg0, %c0_i32, %c0_i32_0 : i32, i32, i32
  }
  func.func @transform_5(%arg0: i32) -> (i32, i32) {
    %c0_i32 = arith.constant 0 : i32
    %c0_i32_0 = arith.constant 0 : i32
    %c0_i32_1 = arith.constant 0 : i32
    return %c0_i32, %c0_i32_0 : i32, i32
  }
  func.func @transform_6(%arg0: i32) -> (i32, i32, i32) {
    %c0_i32 = arith.constant 0 : i32
    %c0_i32_0 = arith.constant 0 : i32
    %c0_i32_1 = arith.constant 0 : i32
    return %arg0, %c0_i32, %c0_i32_0 : i32, i32, i32
  }
  func.func @transform_7(%arg0: i32) -> (i32, i32, i32) {
    %c0_i32 = arith.constant 0 : i32
    %c0_i32_0 = arith.constant 0 : i32
    %c0_i32_1 = arith.constant 0 : i32
    return %arg0, %c0_i32, %c0_i32_0 : i32, i32, i32
  }
}

</mosaic_0001>

<llo_original>
// kernel: tpu_custom_call.1
$region0: #{tpu_custom_call.1}
  #allocation0 [shape = 'u32[]', space=smem, size = 0x4, offset = 0x4, fixed_abs, tag = 'smem constant byte address 0x4 - core index']
  #allocation1 [shape = 'u32[144,128]{1,0:T(1,128)}', space=vmem, size = 0x12000, scoped, tag = 'internal scratch']
  %s0 = inlined_call_operand.vmem [shape: f32[1,64,32], index: 0, kind: input, shape index: {}]
  %s1 = inlined_call_operand.vmem [shape: f32[1,128,32], index: 1, kind: input, shape index: {}]
  %s2 = inlined_call_operand.vmem [shape: f32[32,32], index: 2, kind: input, shape index: {}]
  %s3 = inlined_call_operand.vmem [shape: f32[1,32], index: 3, kind: input, shape index: {}]
  %s4 = inlined_call_operand.vmem [shape: f32[1,1,128], index: 4, kind: input, shape index: {}]
  %s5 = inlined_call_operand.vmem [shape: f32[64,128], index: 5, kind: input, shape index: {}]
  %s6 = inlined_call_operand.vmem [shape: f32[1,64,32], index: 6, kind: output, shape index: {0}]
  %s7 = inlined_call_operand.hbm [shape: f32[1,64,128], index: 7, kind: output, shape index: {1}]
  %8 = xla_tuple %s6, %s7
  %s9 = sld [smem:[#allocation0]]
  $region42: #{tpu_custom_call.1} parent=0
    _
  %s11 = ssub.s32 1, %s9
  %s12 = scalar_select 0, %s11, %s9
  $region1: #{tpu_custom_call.1} parent=0
    #allocation2 [shape = 'u8[32768]{0}', space=vmem, size = 0x8000, scoped, tag = 'output window, operand 1, single buffered']
    #allocation3 [shape = 's32[1]{0}', space=sflag, size = 0x4, scoped, tag = 'scoped memory for tpu_custom_call.1']
    %13 = vsyncpa [#allocation3], 0
    // Predicated region
    $region2: #{tpu_custom_call.1} parent=1 // pred_check
      _
    $region3: #{tpu_custom_call.1} parent=1 // pred_check_branch
      %15 = sbr.rel (0) target = $region5
    $region4: #{tpu_custom_call.1} parent=1 // pred_region
      _
    $region5: #{tpu_custom_call.1} parent=1 // pred_fallthru
      _
    // Predicated region
    $region6: #{tpu_custom_call.1} parent=1 // pred_check
      _
    $region7: #{tpu_custom_call.1} parent=1 // pred_check_branch
      %17 = sbr.rel (0) target = $region9
    $region8: #{tpu_custom_call.1} parent=1 // pred_region
      _
    $region9: #{tpu_custom_call.1} parent=1 // pred_fallthru
      _
    // Predicated region
    $region10: #{tpu_custom_call.1} parent=1 // pred_check
      _
    $region11: #{tpu_custom_call.1} parent=1 // pred_check_branch
      %19 = sbr.rel (0) target = $region13
    $region12: #{tpu_custom_call.1} parent=1 // pred_region
      _
    $region13: #{tpu_custom_call.1} parent=1 // pred_fallthru
      _
    // Predicated region
    $region14: #{tpu_custom_call.1} parent=1 // pred_check
      _
    $region15: #{tpu_custom_call.1} parent=1 // pred_check_branch
      %21 = sbr.rel (0) target = $region17
    $region16: #{tpu_custom_call.1} parent=1 // pred_region
      _
    $region17: #{tpu_custom_call.1} parent=1 // pred_fallthru
      _
    // Predicated region
    $region18: #{tpu_custom_call.1} parent=1 // pred_check
      _
    $region19: #{tpu_custom_call.1} parent=1 // pred_check_branch
      %23 = sbr.rel (0) target = $region21
    $region20: #{tpu_custom_call.1} parent=1 // pred_region
      _
    $region21: #{tpu_custom_call.1} parent=1 // pred_fallthru
      _
    // Predicated region
    $region22: #{tpu_custom_call.1} parent=1 // pred_check
      _
    $region23: #{tpu_custom_call.1} parent=1 // pred_check_branch
      %25 = sbr.rel (0) target = $region25
    $region24: #{tpu_custom_call.1} parent=1 // pred_region
      _
    $region25: #{tpu_custom_call.1} parent=1 // pred_fallthru
      _
    %v26 = vld [vmem:[%s0] sm:$0xff]
    %v27 = vld [vmem:[%s0 + $0x8] sm:$0xff]
    %v28 = vld [vmem:[%s0 + $0x10] sm:$0xff]
    %v29 = vld [vmem:[%s0 + $0x18] sm:$0xff]
    %v30 = vld [vmem:[%s0 + $0x20] sm:$0xff]
    %v31 = vld [vmem:[%s0 + $0x28] sm:$0xff]
    %v32 = vld [vmem:[%s0 + $0x30] sm:$0xff]
    %v33 = vld [vmem:[%s0 + $0x38] sm:$0xff]
    %v34 = vld [vmem:[%s1] sm:$0xff]
    %v35 = vld [vmem:[%s1 + $0x8] sm:$0xff]
    %v36 = vld [vmem:[%s1 + $0x10] sm:$0xff]
    %v37 = vld [vmem:[%s1 + $0x18] sm:$0xff]
    %v38 = vld [vmem:[%s1 + $0x20] sm:$0xff]
    %v39 = vld [vmem:[%s1 + $0x28] sm:$0xff]
    %v40 = vld [vmem:[%s1 + $0x30] sm:$0xff]
    %v41 = vld [vmem:[%s1 + $0x38] sm:$0xff]
    %v42 = vld [vmem:[%s1 + $0x40] sm:$0xff]
    %v43 = vld [vmem:[%s1 + $0x48] sm:$0xff]
    %v44 = vld [vmem:[%s1 + $0x50] sm:$0xff]
    %v45 = vld [vmem:[%s1 + $0x58] sm:$0xff]
    %v46 = vld [vmem:[%s1 + $0x60] sm:$0xff]
    %v47 = vld [vmem:[%s1 + $0x68] sm:$0xff]
    %v48 = vld [vmem:[%s1 + $0x70] sm:$0xff]
    %v49 = vld [vmem:[%s1 + $0x78] sm:$0xff]
    %v50 = vld [vmem:[%s2] sm:$0xff]
    %v51 = vld [vmem:[%s2 + $0x8] sm:$0xff]
    %v52 = vld [vmem:[%s2 + $0x10] sm:$0xff]
    %v53 = vld [vmem:[%s2 + $0x18] sm:$0xff]
    %v54 = vld [vmem:[%s3] sm:$0x1]
    %v56 = vlaneseq
    %v57 = vshrl.u32 %v56, 7
    %v58 = vsub.s32 0, %v57
    %v59 = vrot.slane %v54, %v58
    %vm61 = vcmask 261120
    %v63 = vsel %vm61, %v26, 0
    %v66 = vsel %vm61, %v27, 0
    %v69 = vsel %vm61, %v28, 0
    %v72 = vsel %vm61, %v29, 0
    %v75 = vsel %vm61, %v30, 0
    %v78 = vsel %vm61, %v31, 0
    %v81 = vsel %vm61, %v32, 0
    %v84 = vsel %vm61, %v33, 0
    %86 = vmatprep.subr.mxu0 0.0
    %87 = vmatpush1.msra.mxu0 %v50
    %88 = vmatprep.subr.mxu0 0.0
    %89 = vmatpush1.msra.mxu0 %v51
    %90 = vmatprep.subr.mxu0 0.0
    %91 = vmatpush1.msra.mxu0 %v52
    %92 = vmatprep.subr.mxu0 0.0
    %93 = vmatpush1.msra.mxu0 %v53
    %94 = vmatprep.subr.mxu0 0.0
    %95 = vmatpush1.msra.mxu0 0.0
    %96 = vmatprep.subr.mxu0 0.0
    %97 = vmatpush1.msra.mxu0 0.0
    %98 = vmatprep.subr.mxu0 0.0
    %99 = vmatpush1.msra.mxu0 0.0
    %100 = vmatprep.subr.mxu0 0.0
    %101 = vmatpush1.msra.mxu0 0.0
    %102 = vmatprep.subr.mxu0 0.0
    %103 = vmatpush1.msra.mxu0 0.0
    %104 = vmatprep.subr.mxu0 0.0
    %105 = vmatpush1.msra.mxu0 0.0
    %106 = vmatprep.subr.mxu0 0.0
    %107 = vmatpush1.msra.mxu0 0.0
    %108 = vmatprep.subr.mxu0 0.0
    %109 = vmatpush1.msra.mxu0 0.0
    %110 = vmatprep.subr.mxu0 0.0
    %111 = vmatpush1.msra.mxu0 0.0
    %112 = vmatprep.subr.mxu0 0.0
    %113 = vmatpush1.msra.mxu0 0.0
    %114 = vmatprep.subr.mxu0 0.0
    %115 = vmatpush1.msra.mxu0 0.0
    %116 = vmatprep.subr.mxu0 0.0
    %117 = vmatpush1.msra.mxu0 0.0
    %118 = vmatprep.subr.mxu0 0.0
    %119 = vmatpush1.msra.mxu0 0.0
    %120 = vmatprep.subr.mxu0 0.0
    %121 = vmatpush1.msra.mxu0 0.0
    %122 = vmatprep.subr.mxu0 0.0
    %123 = vmatpush1.msra.mxu0 0.0
    %124 = vmatprep.subr.mxu0 0.0
    %125 = vmatpush1.msra.mxu0 0.0
    %126 = vmatprep.subr.mxu0 0.0
    %127 = vmatpush1.msra.mxu0 0.0
    %128 = vmatprep.subr.mxu0 0.0
    %129 = vmatpush1.msra.mxu0 0.0
    %130 = vmatprep.subr.mxu0 0.0
    %131 = vmatpush1.msra.mxu0 0.0
    %132 = vmatprep.subr.mxu0 0.0
    %133 = vmatpush1.msra.mxu0 0.0
    %134 = vmatprep.subr.mxu0 0.0
    %135 = vmatpush1.msra.mxu0 0.0
    %136 = vmatprep.subr.mxu0 0.0
    %137 = vmatpush1.msra.mxu0 0.0
    %138 = vmatprep.subr.mxu0 0.0
    %139 = vmatpush1.msra.mxu0 0.0
    %140 = vmatprep.subr.mxu0 0.0
    %141 = vmatpush1.msra.mxu0 0.0
    %142 = vmatprep.subr.mxu0 0.0
    %143 = vmatpush1.msra.mxu0 0.0
    %144 = vmatprep.subr.mxu0 0.0
    %145 = vmatpush1.msra.mxu0 0.0
    %146 = vmatprep.subr.mxu0 0.0
    %147 = vmatpush1.msra.mxu0 0.0
    %148 = vmatprep.subr.mxu0 0.0
    %149 = vmatpush1.msra.mxu0 0.0
    %150 = vmatprep.mubr.f32.mxu0 0.0
    %151 = vmatmul.mubr.f32.gmra.mrb[0].mxu0 %v63
    %v152 = vpop.f32.mrb[0].mxu0
    %v153 = vadd.f32 %v59, %v152
    %v154 = vpop.f32.mrb[0].mxu0
    %155 = vmatprep.mubr.f32.mxu0 0.0
    %156 = vmatmul.mubr.f32.gmra.mrb[0].mxu0 %v66
    %v157 = vpop.f32.mrb[0].mxu0
    %v158 = vadd.f32 %v59, %v157
    %v159 = vpop.f32.mrb[0].mxu0
    %160 = vmatprep.mubr.f32.mxu0 0.0
    %161 = vmatmul.mubr.f32.gmra.mrb[0].mxu0 %v69
    %v162 = vpop.f32.mrb[0].mxu0
    %v163 = vadd.f32 %v59, %v162
    %v164 = vpop.f32.mrb[0].mxu0
    %165 = vmatprep.mubr.f32.mxu0 0.0
    %166 = vmatmul.mubr.f32.gmra.mrb[0].mxu0 %v72
    %v167 = vpop.f32.mrb[0].mxu0
    %v168 = vadd.f32 %v59, %v167
    %v169 = vpop.f32.mrb[0].mxu0
    %170 = vmatprep.mubr.f32.mxu0 0.0
    %171 = vmatmul.mubr.f32.gmra.mrb[0].mxu0 %v75
    %v172 = vpop.f32.mrb[0].mxu0
    %v173 = vadd.f32 %v59, %v172
    %v174 = vpop.f32.mrb[0].mxu0
    %175 = vmatprep.mubr.f32.mxu0 0.0
    %176 = vmatmul.mubr.f32.gmra.mrb[0].mxu0 %v78
    %v177 = vpop.f32.mrb[0].mxu0
    %v178 = vadd.f32 %v59, %v177
    %v179 = vpop.f32.mrb[0].mxu0
    %180 = vmatprep.mubr.f32.mxu0 0.0
    %181 = vmatmul.mubr.f32.gmra.mrb[0].mxu0 %v81
    %v182 = vpop.f32.mrb[0].mxu0
    %v183 = vadd.f32 %v59, %v182
    %v184 = vpop.f32.mrb[0].mxu0
    %185 = vmatprep.mubr.f32.mxu0 0.0
    %186 = vmatmul.mubr.f32.gmra.mrb[0].mxu0 %v84
    %v187 = vpop.f32.mrb[0].mxu0
    %v188 = vadd.f32 %v59, %v187
    %v189 = vpop.f32.mrb[0].mxu0
    %190 = vdwg.mxu0
    %v191 = vmul.f32 %v153, 0.17677669
    %v192 = vmul.f32 %v158, 0.17677669
    %v193 = vmul.f32 %v163, 0.17677669
    %v194 = vmul.f32 %v168, 0.17677669
    %v195 = vmul.f32 %v173, 0.17677669
    %v196 = vmul.f32 %v178, 0.17677669
    %v197 = vmul.f32 %v183, 0.17677669
    %v198 = vmul.f32 %v188, 0.17677669
    %v200 = vsel %vm61, %v191, 0
    %v203 = vsel %vm61, %v192, 0
    %v206 = vsel %vm61, %v193, 0
    %v209 = vsel %vm61, %v194, 0
    %v212 = vsel %vm61, %v195, 0
    %v215 = vsel %vm61, %v196, 0
    %v218 = vsel %vm61, %v197, 0
    %v221 = vsel %vm61, %v198, 0
    %v224 = vsel %vm61, %v34, 0
    %v227 = vsel %vm61, %v35, 0
    %v230 = vsel %vm61, %v36, 0
    %v233 = vsel %vm61, %v37, 0
    %v236 = vsel %vm61, %v38, 0
    %v239 = vsel %vm61, %v39, 0
    %v242 = vsel %vm61, %v40, 0
    %v245 = vsel %vm61, %v41, 0
    %v248 = vsel %vm61, %v42, 0
    %v251 = vsel %vm61, %v43, 0
    %v254 = vsel %vm61, %v44, 0
    %v257 = vsel %vm61, %v45, 0
    %v260 = vsel %vm61, %v46, 0
    %v263 = vsel %vm61, %v47, 0
    %v266 = vsel %vm61, %v48, 0
    %v269 = vsel %vm61, %v49, 0
    %271 = vmatprep.subr.mxu0 0.0
    %272 = vmatpush1.xpose.msra.mxu0 %v224
    %273 = vmatprep.subr.mxu0 0.0
    %274 = vmatpush1.xpose.msra.mxu0 %v227
    %275 = vmatprep.subr.mxu0 0.0
    %276 = vmatpush1.xpose.msra.mxu0 %v230
    %277 = vmatprep.subr.mxu0 0.0
    %278 = vmatpush1.xpose.msra.mxu0 %v233
    %279 = vmatprep.subr.mxu0 0.0
    %280 = vmatpush1.xpose.msra.mxu0 %v236
    %281 = vmatprep.subr.mxu0 0.0
    %282 = vmatpush1.xpose.msra.mxu0 %v239
    %283 = vmatprep.subr.mxu0 0.0
    %284 = vmatpush1.xpose.msra.mxu0 %v242
    %285 = vmatprep.subr.mxu0 0.0
    %286 = vmatpush1.xpose.msra.mxu0 %v245
    %287 = vmatprep.subr.mxu0 0.0
    %288 = vmatpush1.xpose.msra.mxu0 %v248
    %289 = vmatprep.subr.mxu0 0.0
    %290 = vmatpush1.xpose.msra.mxu0 %v251
    %291 = vmatprep.subr.mxu0 0.0
    %292 = vmatpush1.xpose.msra.mxu0 %v254
    %293 = vmatprep.subr.mxu0 0.0
    %294 = vmatpush1.xpose.msra.mxu0 %v257
    %295 = vmatprep.subr.mxu0 0.0
    %296 = vmatpush1.xpose.msra.mxu0 %v260
    %297 = vmatprep.subr.mxu0 0.0
    %298 = vmatpush1.xpose.msra.mxu0 %v263
    %299 = vmatprep.subr.mxu0 0.0
    %300 = vmatpush1.xpose.msra.mxu0 %v266
    %301 = vmatprep.subr.mxu0 0.0
    %302 = vmatpush1.xpose.msra.mxu0 %v269
    %303 = vmatprep.subr.mxu0 0.0
    %304 = vmatpush1.xpose.msra.mxu0 0.0
    %305 = vmatprep.subr.mxu0 0.0
    %306 = vmatpush1.xpose.msra.mxu0 0.0
    %307 = vmatprep.subr.mxu0 0.0
    %308 = vmatpush1.xpose.msra.mxu0 0.0
    %309 = vmatprep.subr.mxu0 0.0
    %310 = vmatpush1.xpose.msra.mxu0 0.0
    %311 = vmatprep.subr.mxu0 0.0
    %312 = vmatpush1.xpose.msra.mxu0 0.0
    %313 = vmatprep.subr.mxu0 0.0
    %314 = vmatpush1.xpose.msra.mxu0 0.0
    %315 = vmatprep.subr.mxu0 0.0
    %316 = vmatpush1.xpose.msra.mxu0 0.0
    %317 = vmatprep.subr.mxu0 0.0
    %318 = vmatpush1.xpose.msra.mxu0 0.0
    %319 = vmatprep.subr.mxu0 0.0
    %320 = vmatpush1.xpose.msra.mxu0 0.0
    %321 = vmatprep.subr.mxu0 0.0
    %322 = vmatpush1.xpose.msra.mxu0 0.0
    %323 = vmatprep.subr.mxu0 0.0
    %324 = vmatpush1.xpose.msra.mxu0 0.0
    %325 = vmatprep.subr.mxu0 0.0
    %326 = vmatpush1.xpose.msra.mxu0 0.0
    %327 = vmatprep.subr.mxu0 0.0
    %328 = vmatpush1.xpose.msra.mxu0 0.0
    %329 = vmatprep.subr.mxu0 0.0
    %330 = vmatpush1.xpose.msra.mxu0 0.0
    %331 = vmatprep.subr.mxu0 0.0
    %332 = vmatpush1.xpose.msra.mxu0 0.0
    %333 = vmatprep.subr.mxu0 0.0
    %334 = vmatpush1.xpose.msra.mxu0 0.0
    %335 = vmatprep.mubr.f32.mxu0 0.0
    %336 = vmatmul.mubr.f32.gmra.mrb[0].mxu0 %v200
    %v337 = vpop.f32.mrb[0].mxu0
    %v338 = vadd.f32 0.0, %v337
    %v339 = vpop.f32.mrb[0].mxu0
    %340 = vmatprep.mubr.f32.mxu0 0.0
    %341 = vmatmul.mubr.f32.gmra.mrb[0].mxu0 %v203
    %v342 = vpop.f32.mrb[0].mxu0
    %v343 = vadd.f32 0.0, %v342
    %v344 = vpop.f32.mrb[0].mxu0
    %345 = vmatprep.mubr.f32.mxu0 0.0
    %346 = vmatmul.mubr.f32.gmra.mrb[0].mxu0 %v206
    %v347 = vpop.f32.mrb[0].mxu0
    %v348 = vadd.f32 0.0, %v347
    %v349 = vpop.f32.mrb[0].mxu0
    %350 = vmatprep.mubr.f32.mxu0 0.0
    %351 = vmatmul.mubr.f32.gmra.mrb[0].mxu0 %v209
    %v352 = vpop.f32.mrb[0].mxu0
    %v353 = vadd.f32 0.0, %v352
    %v354 = vpop.f32.mrb[0].mxu0
    %355 = vmatprep.mubr.f32.mxu0 0.0
    %356 = vmatmul.mubr.f32.gmra.mrb[0].mxu0 %v212
    %v357 = vpop.f32.mrb[0].mxu0
    %v358 = vadd.f32 0.0, %v357
    %v359 = vpop.f32.mrb[0].mxu0
    %360 = vmatprep.mubr.f32.mxu0 0.0
    %361 = vmatmul.mubr.f32.gmra.mrb[0].mxu0 %v215
    %v362 = vpop.f32.mrb[0].mxu0
    %v363 = vadd.f32 0.0, %v362
    %v364 = vpop.f32.mrb[0].mxu0
    %365 = vmatprep.mubr.f32.mxu0 0.0
    %366 = vmatmul.mubr.f32.gmra.mrb[0].mxu0 %v218
    %v367 = vpop.f32.mrb[0].mxu0
    %v368 = vadd.f32 0.0, %v367
    %v369 = vpop.f32.mrb[0].mxu0
    %370 = vmatprep.mubr.f32.mxu0 0.0
    %371 = vmatmul.mubr.f32.gmra.mrb[0].mxu0 %v221
    %v372 = vpop.f32.mrb[0].mxu0
    %v373 = vadd.f32 0.0, %v372
    %v374 = vpop.f32.mrb[0].mxu0
    %375 = vdwg.mxu0
    %v376 = vld [vmem:[%s4] sm:$0x1]
    %v377 = vmax.f32 %v376, -1e+30
    %v379 = vlaneseq
    %v380 = vshrl.u32 %v379, 7
    %v381 = vsub.s32 0, %v380
    %v382 = vrot.slane %v377, %v381
    %v384 = vadd.f32 %v338, %v382
    %v385 = vadd.f32 %v343, %v382
    %v386 = vadd.f32 %v348, %v382
    %v387 = vadd.f32 %v353, %v382
    %v388 = vadd.f32 %v358, %v382
    %v389 = vadd.f32 %v363, %v382
    %v390 = vadd.f32 %v368, %v382
    %v391 = vadd.f32 %v373, %v382
    %v392 = vld [vmem:[%s5] sm:$0xff]
    %v393 = vld [vmem:[%s5 + $0x8] sm:$0xff]
    %v394 = vld [vmem:[%s5 + $0x10] sm:$0xff]
    %v395 = vld [vmem:[%s5 + $0x18] sm:$0xff]
    %v396 = vld [vmem:[%s5 + $0x20] sm:$0xff]
    %v397 = vld [vmem:[%s5 + $0x28] sm:$0xff]
    %v398 = vld [vmem:[%s5 + $0x30] sm:$0xff]
    %v399 = vld [vmem:[%s5 + $0x38] sm:$0xff]
    %v400 = vadd.f32 %v384, %v392
    %v401 = vadd.f32 %v385, %v393
    %v402 = vadd.f32 %v386, %v394
    %v403 = vadd.f32 %v387, %v395
    %v404 = vadd.f32 %v388, %v396
    %v405 = vadd.f32 %v389, %v397
    %v406 = vadd.f32 %v390, %v398
    %v407 = vadd.f32 %v391, %v399
    %408 = vmax.xlane.f32.xlu0 %v400
    %v409 = vpop.xlane.xlu0 %408
    %410 = vmax.xlane.f32.xlu0 %v401
    %v411 = vpop.xlane.xlu0 %410
    %412 = vmax.xlane.f32.xlu0 %v402
    %v413 = vpop.xlane.xlu0 %412
    %414 = vmax.xlane.f32.xlu0 %v403
    %v415 = vpop.xlane.xlu0 %414
    %416 = vmax.xlane.f32.xlu0 %v404
    %v417 = vpop.xlane.xlu0 %416
    %418 = vmax.xlane.f32.xlu0 %v405
    %v419 = vpop.xlane.xlu0 %418
    %420 = vmax.xlane.f32.xlu0 %v406
    %v421 = vpop.xlane.xlu0 %420
    %422 = vmax.xlane.f32.xlu0 %v407
    %v423 = vpop.xlane.xlu0 %422
    %v424 = vsub.f32 %v400, %v409
    %v425 = vsub.f32 %v401, %v411
    %v426 = vsub.f32 %v402, %v413
    %v427 = vsub.f32 %v403, %v415
    %v428 = vsub.f32 %v404, %v417
    %v429 = vsub.f32 %v405, %v419
    %v430 = vsub.f32 %v406, %v421
    %v431 = vsub.f32 %v407, %v423
    %v432 = vmul.f32 %v424, 1.442695
    %v433 = vpow.pop %v432
    %v434 = vmul.f32 %v425, 1.442695
    %v435 = vpow.pop %v434
    %v436 = vmul.f32 %v426, 1.442695
    %v437 = vpow.pop %v436
    %v438 = vmul.f32 %v427, 1.442695
    %v439 = vpow.pop %v438
    %v440 = vmul.f32 %v428, 1.442695
    %v441 = vpow.pop %v440
    %v442 = vmul.f32 %v429, 1.442695
    %v443 = vpow.pop %v442
    %v444 = vmul.f32 %v430, 1.442695
    %v445 = vpow.pop %v444
    %v446 = vmul.f32 %v431, 1.442695
    %v447 = vpow.pop %v446
    %448 = vadd.xlane.f32.xlu0 %v433
    %v449 = vpop.xlane.xlu0 %448
    %450 = vadd.xlane.f32.xlu0 %v435
    %v451 = vpop.xlane.xlu0 %450
    %452 = vadd.xlane.f32.xlu0 %v437
    %v453 = vpop.xlane.xlu0 %452
    %454 = vadd.xlane.f32.xlu0 %v439
    %v455 = vpop.xlane.xlu0 %454
    %456 = vadd.xlane.f32.xlu0 %v441
    %v457 = vpop.xlane.xlu0 %456
    %458 = vadd.xlane.f32.xlu0 %v443
    %v459 = vpop.xlane.xlu0 %458
    %460 = vadd.xlane.f32.xlu0 %v445
    %v461 = vpop.xlane.xlu0 %460
    %462 = vadd.xlane.f32.xlu0 %v447
    %v463 = vpop.xlane.xlu0 %462
    %v464 = vrcp.pop %v449
    %v465 = vrcp.pop %v451
    %v466 = vrcp.pop %v453
    %v467 = vrcp.pop %v455
    %v468 = vrcp.pop %v457
    %v469 = vrcp.pop %v459
    %v470 = vrcp.pop %v461
    %v471 = vrcp.pop %v463
    %v472 = vmul.f32 %v433, %v464
    %v473 = vmul.f32 %v435, %v465
    %v474 = vmul.f32 %v437, %v466
    %v475 = vmul.f32 %v439, %v467
    %v476 = vmul.f32 %v441, %v468
    %v477 = vmul.f32 %v443, %v469
    %v478 = vmul.f32 %v445, %v470
    %v479 = vmul.f32 %v447, %v471
    %480 = vmatprep.subr.mxu0 0.0
    %481 = vmatpush1.msra.mxu0 %v34
    %482 = vmatprep.subr.mxu0 0.0
    %483 = vmatpush1.msra.mxu0 %v35
    %484 = vmatprep.subr.mxu0 0.0
    %485 = vmatpush1.msra.mxu0 %v36
    %486 = vmatprep.subr.mxu0 0.0
    %487 = vmatpush1.msra.mxu0 %v37
    %488 = vmatprep.subr.mxu0 0.0
    %489 = vmatpush1.msra.mxu0 %v38
    %490 = vmatprep.subr.mxu0 0.0
    %491 = vmatpush1.msra.mxu0 %v39
    %492 = vmatprep.subr.mxu0 0.0
    %493 = vmatpush1.msra.mxu0 %v40
    %494 = vmatprep.subr.mxu0 0.0
    %495 = vmatpush1.msra.mxu0 %v41
    %496 = vmatprep.subr.mxu0 0.0
    %497 = vmatpush1.msra.mxu0 %v42
    %498 = vmatprep.subr.mxu0 0.0
    %499 = vmatpush1.msra.mxu0 %v43
    %500 = vmatprep.subr.mxu0 0.0
    %501 = vmatpush1.msra.mxu0 %v44
    %502 = vmatprep.subr.mxu0 0.0
    %503 = vmatpush1.msra.mxu0 %v45
    %504 = vmatprep.subr.mxu0 0.0
    %505 = vmatpush1.msra.mxu0 %v46
    %506 = vmatprep.subr.mxu0 0.0
    %507 = vmatpush1.msra.mxu0 %v47
    %508 = vmatprep.subr.mxu0 0.0
    %509 = vmatpush1.msra.mxu0 %v48
    %510 = vmatprep.subr.mxu0 0.0
    %511 = vmatpush1.msra.mxu0 %v49
    %512 = vmatprep.subr.mxu0 0.0
    %513 = vmatpush1.msra.mxu0 0.0
    %514 = vmatprep.subr.mxu0 0.0
    %515 = vmatpush1.msra.mxu0 0.0
    %516 = vmatprep.subr.mxu0 0.0
    %517 = vmatpush1.msra.mxu0 0.0
    %518 = vmatprep.subr.mxu0 0.0
    %519 = vmatpush1.msra.mxu0 0.0
    %520 = vmatprep.subr.mxu0 0.0
    %521 = vmatpush1.msra.mxu0 0.0
    %522 = vmatprep.subr.mxu0 0.0
    %523 = vmatpush1.msra.mxu0 0.0
    %524 = vmatprep.subr.mxu0 0.0
    %525 = vmatpush1.msra.mxu0 0.0
    %526 = vmatprep.subr.mxu0 0.0
    %527 = vmatpush1.msra.mxu0 0.0
    %528 = vmatprep.subr.mxu0 0.0
    %529 = vmatpush1.msra.mxu0 0.0
    %530 = vmatprep.subr.mxu0 0.0
    %531 = vmatpush1.msra.mxu0 0.0
    %532 = vmatprep.subr.mxu0 0.0
    %533 = vmatpush1.msra.mxu0 0.0
    %534 = vmatprep.subr.mxu0 0.0
    %535 = vmatpush1.msra.mxu0 0.0
    %536 = vmatprep.subr.mxu0 0.0
    %537 = vmatpush1.msra.mxu0 0.0
    %538 = vmatprep.subr.mxu0 0.0
    %539 = vmatpush1.msra.mxu0 0.0
    %540 = vmatprep.subr.mxu0 0.0
    %541 = vmatpush1.msra.mxu0 0.0
    %542 = vmatprep.subr.mxu0 0.0
    %543 = vmatpush1.msra.mxu0 0.0
    %544 = vmatprep.mubr.f32.mxu0 0.0
    %545 = vmatmul.mubr.f32.gmra.mrb[0].mxu0 %v472
    %v546 = vpop.f32.mrb[0].mxu0
    %v547 = vadd.f32 0.0, %v546
    %v548 = vpop.f32.mrb[0].mxu0
    %549 = vmatprep.mubr.f32.mxu0 0.0
    %550 = vmatmul.mubr.f32.gmra.mrb[0].mxu0 %v473
    %v551 = vpop.f32.mrb[0].mxu0
    %v552 = vadd.f32 0.0, %v551
    %v553 = vpop.f32.mrb[0].mxu0
    %554 = vmatprep.mubr.f32.mxu0 0.0
    %555 = vmatmul.mubr.f32.gmra.mrb[0].mxu0 %v474
    %v556 = vpop.f32.mrb[0].mxu0
    %v557 = vadd.f32 0.0, %v556
    %v558 = vpop.f32.mrb[0].mxu0
    %559 = vmatprep.mubr.f32.mxu0 0.0
    %560 = vmatmul.mubr.f32.gmra.mrb[0].mxu0 %v475
    %v561 = vpop.f32.mrb[0].mxu0
    %v562 = vadd.f32 0.0, %v561
    %v563 = vpop.f32.mrb[0].mxu0
    %564 = vmatprep.mubr.f32.mxu0 0.0
    %565 = vmatmul.mubr.f32.gmra.mrb[0].mxu0 %v476
    %v566 = vpop.f32.mrb[0].mxu0
    %v567 = vadd.f32 0.0, %v566
    %v568 = vpop.f32.mrb[0].mxu0
    %569 = vmatprep.mubr.f32.mxu0 0.0
    %570 = vmatmul.mubr.f32.gmra.mrb[0].mxu0 %v477
    %v571 = vpop.f32.mrb[0].mxu0
    %v572 = vadd.f32 0.0, %v571
    %v573 = vpop.f32.mrb[0].mxu0
    %574 = vmatprep.mubr.f32.mxu0 0.0
    %575 = vmatmul.mubr.f32.gmra.mrb[0].mxu0 %v478
    %v576 = vpop.f32.mrb[0].mxu0
    %v577 = vadd.f32 0.0, %v576
    %v578 = vpop.f32.mrb[0].mxu0
    %579 = vmatprep.mubr.f32.mxu0 0.0
    %580 = vmatmul.mubr.f32.gmra.mrb[0].mxu0 %v479
    %v581 = vpop.f32.mrb[0].mxu0
    %v582 = vadd.f32 0.0, %v581
    %v583 = vpop.f32.mrb[0].mxu0
    %584 = vdwg.mxu0
    %585 = vst.msk [vmem:[%s6] sm:$0xff] %vm61, %v547
    %586 = vst.msk [vmem:[%s6 + $0x8] sm:$0xff] %vm61, %v552
    %587 = vst.msk [vmem:[%s6 + $0x10] sm:$0xff] %vm61, %v557
    %588 = vst.msk [vmem:[%s6 + $0x18] sm:$0xff] %vm61, %v562
    %589 = vst.msk [vmem:[%s6 + $0x20] sm:$0xff] %vm61, %v567
    %590 = vst.msk [vmem:[%s6 + $0x28] sm:$0xff] %vm61, %v572
    %591 = vst.msk [vmem:[%s6 + $0x30] sm:$0xff] %vm61, %v577
    %592 = vst.msk [vmem:[%s6 + $0x38] sm:$0xff] %vm61, %v582
    %v594 = vlaneseq
    %v595 = vshrl.u32 %v594, 7
    %v596 = vsub.s32 0, %v595
    %v597 = vrot.slane %v376, %v596
    %v599 = vadd.f32 %v338, %v597
    %v600 = vadd.f32 %v343, %v597
    %v601 = vadd.f32 %v348, %v597
    %v602 = vadd.f32 %v353, %v597
    %v603 = vadd.f32 %v358, %v597
    %v604 = vadd.f32 %v363, %v597
    %v605 = vadd.f32 %v368, %v597
    %v606 = vadd.f32 %v373, %v597
    %607 = vst [vmem:[#allocation2] sm:$0xff] %v599
    %608 = vst [vmem:[#allocation2 + $0x8] sm:$0xff] %v600
    %609 = vst [vmem:[#allocation2 + $0x10] sm:$0xff] %v601
    %610 = vst [vmem:[#allocation2 + $0x18] sm:$0xff] %v602
    %611 = vst [vmem:[#allocation2 + $0x20] sm:$0xff] %v603
    %612 = vst [vmem:[#allocation2 + $0x28] sm:$0xff] %v604
    %613 = vst [vmem:[#allocation2 + $0x30] sm:$0xff] %v605
    %614 = vst [vmem:[#allocation2 + $0x38] sm:$0xff] %v606
    // Predicated region
    $region26: #{tpu_custom_call.1} parent=1 // pred_check
      _
    $region27: #{tpu_custom_call.1} parent=1 // pred_check_branch
      %616 = sbr.rel (0) target = $region29
    $region28: #{tpu_custom_call.1} parent=1 // pred_region
      _
    $region29: #{tpu_custom_call.1} parent=1 // pred_fallthru
      _
    // Predicated region
    $region30: #{tpu_custom_call.1} parent=1 // pred_check
      _
    $region31: #{tpu_custom_call.1} parent=1 // pred_check_branch
      %618 = sbr.rel (0) target = $region33
    $region32: #{tpu_custom_call.1} parent=1 // pred_region
      %s620 = ssub.s32 1024, 1024
      %621 = vsyncadd [#allocation3], %s620
      %s622 = sshll.u32 [#allocation2], 4
      %s623 = int_to_ptr.vmem [resolvable:$true] %s622
      %628 = dma.vmem_to_hbm [thread:$0]  %s623, 1024, %s7, [#allocation3], 128, 128, 8
    $region33: #{tpu_custom_call.1} parent=1 // pred_fallthru
      _
    // Predicated region
    $region34: #{tpu_custom_call.1} parent=1 // pred_check
      _
    $region35: #{tpu_custom_call.1} parent=1 // pred_check_branch
      %630 = sbr.rel (0) target = $region37
    $region36: #{tpu_custom_call.1} parent=1 // pred_region
      _
    $region37: #{tpu_custom_call.1} parent=1 // pred_fallthru
      _
    // Predicated region
    $region38: #{tpu_custom_call.1} parent=1 // pred_check
      _
    $region39: #{tpu_custom_call.1} parent=1 // pred_check_branch
      %632 = sbr.rel (0) target = $region41
    $region40: #{tpu_custom_call.1} parent=1 // pred_region
      %633 = dma.done [#allocation3], 1024
    $region41: #{tpu_custom_call.1} parent=1 // pred_fallthru
      _
    %634 = vsyncpa [#allocation3], 1

</llo_original>
